<compile_context>
chip_gen: v7x
topology: tpu7x:2x2x1
jax: 0.10.0
libtpu: 0.0.40
codegen_flags: <defaults>
</compile_context>

<pallas_src>
import functools

import jax
import jax.numpy as jnp
from jax.experimental import pallas as pl
from jax.experimental.pallas import tpu as pltpu

_LANE = 128


def _round_up(x: int, m: int) -> int:
    return ((x + m - 1) // m) * m


def _sublane_for_dtype(dtype) -> int:
    # 8 rows/vreg for 32-bit, 16 for bf16, 32 for int8/fp8 (packed sublanes).
    return max(8, 32 // jnp.dtype(dtype).itemsize)


def _pick_batch_tile(B: int, block_b: int, sub: int) -> int:
    """Batch tile that bounds padding waste and feeds both v7x TensorCores."""
    n = max(1, -(-B // block_b))      # tiles if capped at block_b
    if n == 1 and B >= 512:           # v7x megacore: >=2 grid steps when batch is big
        n = 2
    tb = _round_up(-(-B // n), sub)
    if tb > 128:                      # full 128-row MXU passes for large tiles
        tb = _round_up(tb, 128)
    return min(tb, _round_up(block_b, sub))


# ---------------------------------------------------------------------------
# Kernel: one batch tile x one hidden tile per grid step.
#   grid = (B_p // TB, H_p // TH), hidden axis innermost ("arbitrary").
#   acc_ref persists across the hidden axis; output written at the last k.
# ---------------------------------------------------------------------------
def mlp_kernel(x_ref, w1_ref, w2_ref, b2_ref, o_ref, acc_ref):
    k = pl.program_id(1)

    @pl.when(k == 0)
    def _():
        acc_ref[...] = jnp.zeros_like(acc_ref)

    # fc1 chunk on the MXU (f32 accumulation), ReLU on the VPU (f32).
    h = jnp.dot(x_ref[...], w1_ref[...], preferred_element_type=jnp.float32)
    h = jnp.maximum(h, 0.0)
    # fc2 chunk on the MXU, accumulated in the resident f32 scratch.
    acc_ref[...] += jnp.dot(h.astype(w2_ref.dtype), w2_ref[...],
                            preferred_element_type=jnp.float32)

    @pl.when(k == pl.num_programs(1) - 1)
    def _():
        # b2 is already f32: single add in the store epilogue.
        o_ref[...] = (acc_ref[...] + b2_ref[...]).astype(o_ref.dtype)


# ---------------------------------------------------------------------------
# One-time parameter preparation (padding + optional cast) -- hoisted out of
# the forward hot path so weight HBM traffic is not doubled per call.
# ---------------------------------------------------------------------------
def prepare_params(w1, w2, b2, *, compute_dtype=None, block_b: int = 512,
                   vmem_budget_bytes: int = 44 * 1024 * 1024):
    """w1: [input, hidden]  w2: [hidden, n_classes]  b2: [n_classes] or [1, n_classes]."""
    K, H = w1.shape
    H2, N = w2.shape
    assert H == H2
    b2 = jnp.asarray(b2).reshape(1, N)

    w_dtype = jnp.dtype(compute_dtype) if compute_dtype is not None else jnp.dtype(w1.dtype)
    w_isz = w_dtype.itemsize

    K_p = _round_up(K, _LANE)
    H_p = _round_up(H, _LANE)
    N_p = _round_up(N, _LANE)

    # Choose the hidden tile so resident weights + streams fit the VMEM budget
    # (conservative: assumes the max batch tile and f32 outputs).
    def footprint(th, n_wbuf):
        return (n_wbuf * (K_p * th + th * N_p) * w_isz   # w1/w2 buffers
                + N_p * 4                                 # f32 bias
                + 2 * block_b * K_p * w_isz               # x (double-buffered)
                + 2 * block_b * N_p * 4                   # out (double-buffered)
                + block_b * N_p * 4                       # f32 accumulator scratch
                + block_b * th * (4 + w_isz))             # h (f32) + cast copy

    if footprint(H_p, 1) <= vmem_budget_bytes:
        TH = H_p
    else:
        TH = H_p
        for c in (4096, 2048, 1024, 512, 256, 128):
            if c >= H_p:
                continue
            TH = c
            if footprint(c, 2) <= vmem_budget_bytes:
                break
        H_p = _round_up(H, TH)       # hidden padded to a multiple of the tile

    w1p = w1.astype(w_dtype)
    w2p = w2.astype(w_dtype)
    if (K_p, H_p) != (K, H):
        w1p = jnp.pad(w1p, ((0, K_p - K), (0, H_p - H)))
    if (H_p, N_p) != (H, N):
        w2p = jnp.pad(w2p, ((0, H_p - H), (0, N_p - N)))
    b2p = b2.astype(jnp.float32)
    if N_p != N:
        b2p = jnp.pad(b2p, ((0, 0), (0, N_p - N)))

    return {"w1": w1p, "w2": w2p, "b2": b2p,
            "n_classes": N, "hidden_tile": TH}


# ---------------------------------------------------------------------------
# Forward: relu(x @ w1) @ w2 + b2   (only x is padded per call)
# ---------------------------------------------------------------------------
@functools.partial(jax.jit,
                   static_argnames=("n_classes", "hidden_tile", "block_b", "x_buffers"))
def mlp_forward(x, w1, w2, b2, *, n_classes: int, hidden_tile: int,
                block_b: int = 512, x_buffers: int = 2):
    B, K = x.shape
    K_p, H_p = w1.shape
    H_p2, N_p = w2.shape
    assert K <= K_p and H_p == H_p2 and b2.shape == (1, N_p)

    out_dtype = x.dtype
    compute_dtype = w1.dtype
    if x.dtype != compute_dtype:
        x = x.astype(compute_dtype)

    sub = _sublane_for_dtype(compute_dtype)
    TB = _pick_batch_tile(B, block_b, sub)
    B_p = _round_up(B, TB)

    if (B_p, K_p) != (B, K):
        x = jnp.pad(x, ((0, B_p - B), (0, K_p - K)))

    TH = hidden_tile
    n_b = B_p // TB
    n_h = H_p // TH
    w_buf = 1 if n_h == 1 else 2     # single-buffer invariant weights

    w_isz = jnp.dtype(compute_dtype).itemsize
    o_isz = jnp.dtype(out_dtype).itemsize

    vmem_needed = (w_buf * (K_p * TH + TH * N_p) * w_isz   # weight buffers
                   + N_p * 4                               # bias (f32)
                   + x_buffers * TB * K_p * w_isz          # x stream
                   + 2 * TB * N_p * o_isz                  # out stream
                   + TB * N_p * 4                          # accumulator scratch
                   + TB * TH * (4 + w_isz))                # h intermediate + cast
    vmem_limit = min(int(vmem_needed * 1.25) + (4 << 20), 100 * 1024 * 1024)
    vmem_limit = max(vmem_limit, 32 * 1024 * 1024)

    cost = pl.CostEstimate(
        flops=2 * B_p * H_p * (K_p + N_p),
        transcendentals=0,
        bytes_accessed=(B_p * K_p + K_p * H_p + H_p * N_p) * w_isz
        + N_p * 4 + B_p * N_p * o_isz,
    )

    out_padded = pl.pallas_call(
        mlp_kernel,
        out_shape=jax.ShapeDtypeStruct((B_p, N_p), out_dtype),
        grid_spec=pltpu.PrefetchScalarGridSpec(
            num_scalar_prefetch=0,
            grid=(n_b, n_h),
            in_specs=[
                pl.BlockSpec((TB, K_p), lambda i, k: (i, 0),
                             pipeline_mode=pl.Buffered(x_buffers)),  # x tile (streamed)
                pl.BlockSpec((K_p, TH), lambda i, k: (0, k),
                             pipeline_mode=pl.Buffered(w_buf)),      # w1 tile
                pl.BlockSpec((TH, N_p), lambda i, k: (k, 0),
                             pipeline_mode=pl.Buffered(w_buf)),      # w2 tile
                pl.BlockSpec((1, N_p), lambda i, k: (0, 0),
                             pipeline_mode=pl.Buffered(1)),          # f32 bias, resident
            ],
            out_specs=pl.BlockSpec((TB, N_p), lambda i, k: (i, 0)),
            scratch_shapes=[pltpu.VMEM((TB, N_p), jnp.float32)],
        ),
        compiler_params=pltpu.CompilerParams(
            dimension_semantics=("parallel", "arbitrary"),
            vmem_limit_bytes=vmem_limit,
        ),
        cost_estimate=cost,
    )(x, w1, w2, b2)

    return out_padded[:B, :n_classes]


def init_params(key, input_size, hidden_size, n_classes, dtype=jnp.float32):
    """Deterministic init mimicking nn.Linear's uniform(-1/sqrt(fan_in), +)."""
    k1, k2, k3 = jax.random.split(key, 3)
    bound1 = 1.0 / (input_size ** 0.5)
    bound2 = 1.0 / (hidden_size ** 0.5)
    # stored already transposed to [in, out]
    w1 = jax.random.uniform(k1, (input_size, hidden_size), dtype,
                            minval=-bound1, maxval=bound1)
    w2 = jax.random.uniform(k2, (hidden_size, n_classes), dtype,
                            minval=-bound2, maxval=bound2)
    b2 = jax.random.uniform(k3, (1, n_classes), dtype,
                            minval=-bound2, maxval=bound2)
    return w1, w2, b2


if __name__ == "__main__":
    key = jax.random.PRNGKey(0)
    batch, input_size, hidden_size, n_classes = 8, 32, 64, 16

    kx, kp = jax.random.split(key)
    x = jax.random.normal(kx, (batch, input_size), jnp.float32)
    w1, w2, b2 = init_params(kp, input_size, hidden_size, n_classes)

    ref = jnp.maximum(x @ w1, 0.0) @ w2 + b2

    # f32 operand path (exact vs. the JAX reference)
    params = prepare_params(w1, w2, b2)
    out = mlp_forward(x, params["w1"], params["w2"], params["b2"],
                      n_classes=params["n_classes"],
                      hidden_tile=params["hidden_tile"])
    out = jax.block_until_ready(out)
    assert out.shape == (batch, n_classes)
    assert jnp.allclose(out, ref, atol=1e-5, rtol=1e-5)

    # bf16 operand path (f32 accumulation) -- looser tolerance, smoke test
    params_bf16 = prepare_params(w1, w2, b2, compute_dtype=jnp.bfloat16)
    out_bf16 = mlp_forward(x, params_bf16["w1"], params_bf16["w2"], params_bf16["b2"],
                           n_classes=params_bf16["n_classes"],
                           hidden_tile=params_bf16["hidden_tile"])
    out_bf16 = jax.block_until_ready(out_bf16)
    assert out_bf16.shape == (batch, n_classes)
    assert jnp.allclose(out_bf16, ref, atol=1e-1, rtol=1e-1)

    print("KERNEL_OK")
</pallas_src>

<mosaic_0001>
module attributes {stable_mosaic.version = 11 : i64} {
  func.func @mlp_kernel(%arg0: i32, %arg1: i32, %arg2: memref<8x128xf32, #tpu.memory_space<vmem>>, %arg3: memref<128x128xf32, #tpu.memory_space<vmem>>, %arg4: memref<128x128xf32, #tpu.memory_space<vmem>>, %arg5: memref<1x128xf32, #tpu.memory_space<vmem>>, %arg6: memref<8x128xf32, #tpu.memory_space<vmem>>, %arg7: memref<8x128xf32, #tpu.memory_space<vmem>>) attributes {dimension_semantics = [#tpu.dimension_semantics<parallel>, #tpu.dimension_semantics<arbitrary>], iteration_bounds = array<i64: 1, 1>, scalar_prefetch = 0 : i64, scratch_operands = 1 : i64, tpu.core_type = #tpu.core_type<tc>, window_params = [{pipeline_mode = #tpu.pipeline_mode<double_buffered>, transform_indices = @transform_0, window_bounds = array<i64: 8, 128>}, {pipeline_mode = #tpu.pipeline_mode<synchronous>, transform_indices = @transform_1, window_bounds = array<i64: 128, 128>}, {pipeline_mode = #tpu.pipeline_mode<synchronous>, transform_indices = @transform_2, window_bounds = array<i64: 128, 128>}, {pipeline_mode = #tpu.pipeline_mode<synchronous>, transform_indices = @transform_3, window_bounds = array<i64: 1, 128>}, {transform_indices = @transform_4, window_bounds = array<i64: 8, 128>}]} {
    %c0_i32 = arith.constant 0 : i32
    %0 = arith.cmpi eq, %arg1, %c0_i32 : i32
    %1 = arith.extui %0 : i1 to i32
    %c0_i32_0 = arith.constant 0 : i32
    %2 = arith.cmpi ne, %1, %c0_i32_0 : i32
    scf.if %2 {
      %cst_14 = arith.constant 0.000000e+00 : f32
      %16 = vector.broadcast %cst_14 : f32 to vector<8x128xf32>
      %c0_15 = arith.constant 0 : index
      %c0_16 = arith.constant 0 : index
      %17 = vector.load %arg7[%c0_15, %c0_16] : memref<8x128xf32, #tpu.memory_space<vmem>>, vector<8x128xf32>
      tpu.vector_store %arg7[%c0_15, %c0_16], %16 {strides = array<i32>} : memref<8x128xf32, #tpu.memory_space<vmem>>, vector<8x128xf32>,
    } else {
    }
    %c0 = arith.constant 0 : index
    %c0_1 = arith.constant 0 : index
    %3 = vector.load %arg2[%c0, %c0_1] : memref<8x128xf32, #tpu.memory_space<vmem>>, vector<8x128xf32>
    %c0_2 = arith.constant 0 : index
    %c0_3 = arith.constant 0 : index
    %4 = vector.load %arg3[%c0_2, %c0_3] : memref<128x128xf32, #tpu.memory_space<vmem>>, vector<128x128xf32>
    %cst = arith.constant dense<0.000000e+00> : vector<8x128xf32>
    %5 = tpu.matmul %3, %4, %cst {dimension_numbers = #tpu.dot_dimension_numbers<[1], [0], [0], [1], [0, 0, 1, 1], [], []>} : vector<8x128xf32>, vector<128x128xf32>, vector<8x128xf32> -> vector<8x128xf32>
    %cst_4 = arith.constant 0.000000e+00 : f32
    %6 = vector.broadcast %cst_4 : f32 to vector<8x128xf32>
    %7 = arith.maximumf %5, %6 : vector<8x128xf32>
    %c0_5 = arith.constant 0 : index
    %c0_6 = arith.constant 0 : index
    %8 = vector.load %arg7[%c0_5, %c0_6] : memref<8x128xf32, #tpu.memory_space<vmem>>, vector<8x128xf32>
    %c0_7 = arith.constant 0 : index
    %c0_8 = arith.constant 0 : index
    %9 = vector.load %arg4[%c0_7, %c0_8] : memref<128x128xf32, #tpu.memory_space<vmem>>, vector<128x128xf32>
    %cst_9 = arith.constant dense<0.000000e+00> : vector<8x128xf32>
    %10 = tpu.matmul %7, %9, %cst_9 {dimension_numbers = #tpu.dot_dimension_numbers<[1], [0], [0], [1], [0, 0, 1, 1], [], []>} : vector<8x128xf32>, vector<128x128xf32>, vector<8x128xf32> -> vector<8x128xf32>
    %11 = arith.addf %8, %10 : vector<8x128xf32>
    %c0_10 = arith.constant 0 : index
    %c0_11 = arith.constant 0 : index
    %12 = vector.load %arg7[%c0_10, %c0_11] : memref<8x128xf32, #tpu.memory_space<vmem>>, vector<8x128xf32>
    tpu.vector_store %arg7[%c0_10, %c0_11], %11 {strides = array<i32>} : memref<8x128xf32, #tpu.memory_space<vmem>>, vector<8x128xf32>,
    %c0_i32_12 = arith.constant 0 : i32
    %13 = arith.cmpi eq, %arg1, %c0_i32_12 : i32
    %14 = arith.extui %13 : i1 to i32
    %c0_i32_13 = arith.constant 0 : i32
    %15 = arith.cmpi ne, %14, %c0_i32_13 : i32
    scf.if %15 {
      %c0_14 = arith.constant 0 : index
      %c0_15 = arith.constant 0 : index
      %16 = vector.load %arg7[%c0_14, %c0_15] : memref<8x128xf32, #tpu.memory_space<vmem>>, vector<8x128xf32>
      %c0_16 = arith.constant 0 : index
      %c0_17 = arith.constant 0 : index
      %17 = vector.load %arg5[%c0_16, %c0_17] : memref<1x128xf32, #tpu.memory_space<vmem>>, vector<1x128xf32>
      %18 = vector.broadcast %17 : vector<1x128xf32> to vector<8x128xf32>
      %19 = arith.addf %16, %18 : vector<8x128xf32>
      %c0_18 = arith.constant 0 : index
      %c0_19 = arith.constant 0 : index
      %20 = vector.load %arg6[%c0_18, %c0_19] : memref<8x128xf32, #tpu.memory_space<vmem>>, vector<8x128xf32>
      tpu.vector_store %arg6[%c0_18, %c0_19], %19 {strides = array<i32>} : memref<8x128xf32, #tpu.memory_space<vmem>>, vector<8x128xf32>,
    } else {
    }
    return
  }
  func.func @transform_0(%arg0: i32, %arg1: i32) -> (i32, i32) {
    %c0_i32 = arith.constant 0 : i32
    %c0_i32_0 = arith.constant 0 : i32
    return %arg0, %c0_i32 : i32, i32
  }
  func.func @transform_1(%arg0: i32, %arg1: i32) -> (i32, i32) {
    %c0_i32 = arith.constant 0 : i32
    %c0_i32_0 = arith.constant 0 : i32
    return %c0_i32, %arg1 : i32, i32
  }
  func.func @transform_2(%arg0: i32, %arg1: i32) -> (i32, i32) {
    %c0_i32 = arith.constant 0 : i32
    %c0_i32_0 = arith.constant 0 : i32
    return %arg1, %c0_i32 : i32, i32
  }
  func.func @transform_3(%arg0: i32, %arg1: i32) -> (i32, i32) {
    %c0_i32 = arith.constant 0 : i32
    %c0_i32_0 = arith.constant 0 : i32
    %c0_i32_1 = arith.constant 0 : i32
    return %c0_i32, %c0_i32_0 : i32, i32
  }
  func.func @transform_4(%arg0: i32, %arg1: i32) -> (i32, i32) {
    %c0_i32 = arith.constant 0 : i32
    %c0_i32_0 = arith.constant 0 : i32
    return %arg0, %c0_i32 : i32, i32
  }
}

</mosaic_0001>

<llo_original>
// kernel: mlp_forward.1
$region0: #{mlp_forward.1}
  #allocation0 [shape = 'u32[]', space=smem, size = 0x4, offset = 0x4, fixed_abs, tag = 'smem constant byte address 0x4 - core index']
  #allocation1 [shape = 'u32[144,128]{1,0:T(1,128)}', space=vmem, size = 0x12000, scoped, tag = 'internal scratch']
  #allocation2 [shape = 'f32[8,128]{1,0:T(8,128)}', space=vmem, size = 0x1000, scoped, tag = 'scratch operand']
  %s0 = inlined_call_operand.vmem [shape: f32[8,128], index: 0, kind: input, shape index: {}]
  %s1 = inlined_call_operand.hbm [shape: f32[128,128], index: 1, kind: input, shape index: {}]
  %s2 = inlined_call_operand.hbm [shape: f32[128,128], index: 2, kind: input, shape index: {}]
  %s3 = inlined_call_operand.vmem [shape: f32[1,128], index: 3, kind: input, shape index: {}]
  %s4 = inlined_call_operand.hbm [shape: f32[8,128], index: 4, kind: output, shape index: {}]
  %s5 = sld [smem:[#allocation0]]
  $region42: #{mlp_forward.1} parent=0
    _
  %s7 = ssub.s32 1, %s5
  %s8 = scalar_select 0, %s7, %s5
  $region1: #{mlp_forward.1} parent=0
    #allocation3 [shape = 'u8[65536]{0}', space=vmem, size = 0x10000, scoped, tag = 'input window, operand 1, single buffered']
    #allocation4 [shape = 's32[1]{0}', space=sflag, size = 0x4, scoped, tag = 'scoped memory for mlp_forward.1']
    #allocation5 [shape = 's32[1]{0}', space=sflag, size = 0x4, scoped, tag = 'scoped memory for mlp_forward.1']
    #allocation6 [shape = 'u8[65536]{0}', space=vmem, size = 0x10000, scoped, tag = 'input window, operand 2, single buffered']
    #allocation7 [shape = 's32[1]{0}', space=sflag, size = 0x4, scoped, tag = 'scoped memory for mlp_forward.1']
    #allocation8 [shape = 'u8[4096]{0}', space=vmem, size = 0x1000, scoped, tag = 'output window, operand 0, single buffered']
    %9 = vsyncpa [#allocation4], 0
    %10 = vsyncpa [#allocation7], 0
    %11 = vsyncpa [#allocation5], 0
    // Predicated region
    $region2: #{mlp_forward.1} parent=1 // pred_check
      _
    $region3: #{mlp_forward.1} parent=1 // pred_check_branch
      %13 = sbr.rel (0) target = $region5
    $region4: #{mlp_forward.1} parent=1 // pred_region
      _
    $region5: #{mlp_forward.1} parent=1 // pred_fallthru
      _
    // Predicated region
    $region6: #{mlp_forward.1} parent=1 // pred_check
      _
    $region7: #{mlp_forward.1} parent=1 // pred_check_branch
      %15 = sbr.rel (0) target = $region9
    $region8: #{mlp_forward.1} parent=1 // pred_region
      %s17 = ssub.s32 2048, 2048
      %18 = vsyncadd [#allocation4], %s17
      %s19 = sshll.u32 [#allocation3], 4
      %s20 = int_to_ptr.vmem [resolvable:$true] %s19
      %25 = dma.hbm_to_vmem [thread:$0]  %s1, 2048, %s20, [#allocation4], 128, 128, 8
    $region9: #{mlp_forward.1} parent=1 // pred_fallthru
      _
    // Predicated region
    $region10: #{mlp_forward.1} parent=1 // pred_check
      _
    $region11: #{mlp_forward.1} parent=1 // pred_check_branch
      %27 = sbr.rel (0) target = $region13
    $region12: #{mlp_forward.1} parent=1 // pred_region
      %s29 = ssub.s32 2048, 2048
      %30 = vsyncadd [#allocation7], %s29
      %s31 = sshll.u32 [#allocation6], 4
      %s32 = int_to_ptr.vmem [resolvable:$true] %s31
      %37 = dma.hbm_to_vmem [thread:$0]  %s2, 2048, %s32, [#allocation7], 128, 128, 8
    $region13: #{mlp_forward.1} parent=1 // pred_fallthru
      _
    // Predicated region
    $region14: #{mlp_forward.1} parent=1 // pred_check
      _
    $region15: #{mlp_forward.1} parent=1 // pred_check_branch
      %39 = sbr.rel (0) target = $region17
    $region16: #{mlp_forward.1} parent=1 // pred_region
      _
    $region17: #{mlp_forward.1} parent=1 // pred_fallthru
      _
    // Predicated region
    $region18: #{mlp_forward.1} parent=1 // pred_check
      _
    $region19: #{mlp_forward.1} parent=1 // pred_check_branch
      %41 = sbr.rel (0) target = $region21
    $region20: #{mlp_forward.1} parent=1 // pred_region
      %42 = dma.done [#allocation4], 2048
    $region21: #{mlp_forward.1} parent=1 // pred_fallthru
      _
    // Predicated region
    $region22: #{mlp_forward.1} parent=1 // pred_check
      _
    $region23: #{mlp_forward.1} parent=1 // pred_check_branch
      %44 = sbr.rel (0) target = $region25
    $region24: #{mlp_forward.1} parent=1 // pred_region
      %45 = dma.done [#allocation7], 2048
    $region25: #{mlp_forward.1} parent=1 // pred_fallthru
      _
    %p46 = scmp.eq.s32.totalorder 0, 0
    // Predicated region
    $region26: #{mlp_forward.1} parent=1 // pred_check
      %p47 = pneg %p46
    $region27: #{mlp_forward.1} parent=1 // pred_check_branch
      %49 = sbr.rel (%p47) target = $region29
    $region28: #{mlp_forward.1} parent=1 // pred_region
      %50 = vst [vmem:[#allocation2] sm:$0xff] 0.0
    $region29: #{mlp_forward.1} parent=1 // pred_fallthru
      _
    %v51 = vld [vmem:[%s0] sm:$0xff]
    %v52 = vld [vmem:[#allocation3] sm:$0xff]
    %v53 = vld [vmem:[#allocation3 + $0x8] sm:$0xff]
    %v54 = vld [vmem:[#allocation3 + $0x10] sm:$0xff]
    %v55 = vld [vmem:[#allocation3 + $0x18] sm:$0xff]
    %v56 = vld [vmem:[#allocation3 + $0x20] sm:$0xff]
    %v57 = vld [vmem:[#allocation3 + $0x28] sm:$0xff]
    %v58 = vld [vmem:[#allocation3 + $0x30] sm:$0xff]
    %v59 = vld [vmem:[#allocation3 + $0x38] sm:$0xff]
    %v60 = vld [vmem:[#allocation3 + $0x40] sm:$0xff]
    %v61 = vld [vmem:[#allocation3 + $0x48] sm:$0xff]
    %v62 = vld [vmem:[#allocation3 + $0x50] sm:$0xff]
    %v63 = vld [vmem:[#allocation3 + $0x58] sm:$0xff]
    %v64 = vld [vmem:[#allocation3 + $0x60] sm:$0xff]
    %v65 = vld [vmem:[#allocation3 + $0x68] sm:$0xff]
    %v66 = vld [vmem:[#allocation3 + $0x70] sm:$0xff]
    %v67 = vld [vmem:[#allocation3 + $0x78] sm:$0xff]
    %68 = vmatprep.subr.mxu0 0.0
    %69 = vmatpush1.msra.mxu0 %v52
    %70 = vmatprep.subr.mxu0 0.0
    %71 = vmatpush1.msra.mxu0 %v53
    %72 = vmatprep.subr.mxu0 0.0
    %73 = vmatpush1.msra.mxu0 %v54
    %74 = vmatprep.subr.mxu0 0.0
    %75 = vmatpush1.msra.mxu0 %v55
    %76 = vmatprep.subr.mxu0 0.0
    %77 = vmatpush1.msra.mxu0 %v56
    %78 = vmatprep.subr.mxu0 0.0
    %79 = vmatpush1.msra.mxu0 %v57
    %80 = vmatprep.subr.mxu0 0.0
    %81 = vmatpush1.msra.mxu0 %v58
    %82 = vmatprep.subr.mxu0 0.0
    %83 = vmatpush1.msra.mxu0 %v59
    %84 = vmatprep.subr.mxu0 0.0
    %85 = vmatpush1.msra.mxu0 %v60
    %86 = vmatprep.subr.mxu0 0.0
    %87 = vmatpush1.msra.mxu0 %v61
    %88 = vmatprep.subr.mxu0 0.0
    %89 = vmatpush1.msra.mxu0 %v62
    %90 = vmatprep.subr.mxu0 0.0
    %91 = vmatpush1.msra.mxu0 %v63
    %92 = vmatprep.subr.mxu0 0.0
    %93 = vmatpush1.msra.mxu0 %v64
    %94 = vmatprep.subr.mxu0 0.0
    %95 = vmatpush1.msra.mxu0 %v65
    %96 = vmatprep.subr.mxu0 0.0
    %97 = vmatpush1.msra.mxu0 %v66
    %98 = vmatprep.subr.mxu0 0.0
    %99 = vmatpush1.msra.mxu0 %v67
    %100 = vmatprep.subr.mxu0 0.0
    %101 = vmatpush1.msra.mxu0 0.0
    %102 = vmatprep.subr.mxu0 0.0
    %103 = vmatpush1.msra.mxu0 0.0
    %104 = vmatprep.subr.mxu0 0.0
    %105 = vmatpush1.msra.mxu0 0.0
    %106 = vmatprep.subr.mxu0 0.0
    %107 = vmatpush1.msra.mxu0 0.0
    %108 = vmatprep.subr.mxu0 0.0
    %109 = vmatpush1.msra.mxu0 0.0
    %110 = vmatprep.subr.mxu0 0.0
    %111 = vmatpush1.msra.mxu0 0.0
    %112 = vmatprep.subr.mxu0 0.0
    %113 = vmatpush1.msra.mxu0 0.0
    %114 = vmatprep.subr.mxu0 0.0
    %115 = vmatpush1.msra.mxu0 0.0
    %116 = vmatprep.subr.mxu0 0.0
    %117 = vmatpush1.msra.mxu0 0.0
    %118 = vmatprep.subr.mxu0 0.0
    %119 = vmatpush1.msra.mxu0 0.0
    %120 = vmatprep.subr.mxu0 0.0
    %121 = vmatpush1.msra.mxu0 0.0
    %122 = vmatprep.subr.mxu0 0.0
    %123 = vmatpush1.msra.mxu0 0.0
    %124 = vmatprep.subr.mxu0 0.0
    %125 = vmatpush1.msra.mxu0 0.0
    %126 = vmatprep.subr.mxu0 0.0
    %127 = vmatpush1.msra.mxu0 0.0
    %128 = vmatprep.subr.mxu0 0.0
    %129 = vmatpush1.msra.mxu0 0.0
    %130 = vmatprep.subr.mxu0 0.0
    %131 = vmatpush1.msra.mxu0 0.0
    %132 = vmatprep.mubr.f32.mxu0 0.0
    %133 = vmatmul.mubr.f32.gmra.mrb[0].mxu0 %v51
    %v134 = vpop.f32.mrb[0].mxu0
    %v135 = vadd.f32 0.0, %v134
    %v136 = vpop.f32.mrb[0].mxu0
    %137 = vdwg.mxu0
    %v138 = vmax.f32 %v135, 0.0
    %v139 = vld [vmem:[#allocation2] sm:$0xff]
    %v140 = vld [vmem:[#allocation6] sm:$0xff]
    %v141 = vld [vmem:[#allocation6 + $0x8] sm:$0xff]
    %v142 = vld [vmem:[#allocation6 + $0x10] sm:$0xff]
    %v143 = vld [vmem:[#allocation6 + $0x18] sm:$0xff]
    %v144 = vld [vmem:[#allocation6 + $0x20] sm:$0xff]
    %v145 = vld [vmem:[#allocation6 + $0x28] sm:$0xff]
    %v146 = vld [vmem:[#allocation6 + $0x30] sm:$0xff]
    %v147 = vld [vmem:[#allocation6 + $0x38] sm:$0xff]
    %v148 = vld [vmem:[#allocation6 + $0x40] sm:$0xff]
    %v149 = vld [vmem:[#allocation6 + $0x48] sm:$0xff]
    %v150 = vld [vmem:[#allocation6 + $0x50] sm:$0xff]
    %v151 = vld [vmem:[#allocation6 + $0x58] sm:$0xff]
    %v152 = vld [vmem:[#allocation6 + $0x60] sm:$0xff]
    %v153 = vld [vmem:[#allocation6 + $0x68] sm:$0xff]
    %v154 = vld [vmem:[#allocation6 + $0x70] sm:$0xff]
    %v155 = vld [vmem:[#allocation6 + $0x78] sm:$0xff]
    %156 = vmatprep.subr.mxu0 0.0
    %157 = vmatpush1.msra.mxu0 %v140
    %158 = vmatprep.subr.mxu0 0.0
    %159 = vmatpush1.msra.mxu0 %v141
    %160 = vmatprep.subr.mxu0 0.0
    %161 = vmatpush1.msra.mxu0 %v142
    %162 = vmatprep.subr.mxu0 0.0
    %163 = vmatpush1.msra.mxu0 %v143
    %164 = vmatprep.subr.mxu0 0.0
    %165 = vmatpush1.msra.mxu0 %v144
    %166 = vmatprep.subr.mxu0 0.0
    %167 = vmatpush1.msra.mxu0 %v145
    %168 = vmatprep.subr.mxu0 0.0
    %169 = vmatpush1.msra.mxu0 %v146
    %170 = vmatprep.subr.mxu0 0.0
    %171 = vmatpush1.msra.mxu0 %v147
    %172 = vmatprep.subr.mxu0 0.0
    %173 = vmatpush1.msra.mxu0 %v148
    %174 = vmatprep.subr.mxu0 0.0
    %175 = vmatpush1.msra.mxu0 %v149
    %176 = vmatprep.subr.mxu0 0.0
    %177 = vmatpush1.msra.mxu0 %v150
    %178 = vmatprep.subr.mxu0 0.0
    %179 = vmatpush1.msra.mxu0 %v151
    %180 = vmatprep.subr.mxu0 0.0
    %181 = vmatpush1.msra.mxu0 %v152
    %182 = vmatprep.subr.mxu0 0.0
    %183 = vmatpush1.msra.mxu0 %v153
    %184 = vmatprep.subr.mxu0 0.0
    %185 = vmatpush1.msra.mxu0 %v154
    %186 = vmatprep.subr.mxu0 0.0
    %187 = vmatpush1.msra.mxu0 %v155
    %188 = vmatprep.subr.mxu0 0.0
    %189 = vmatpush1.msra.mxu0 0.0
    %190 = vmatprep.subr.mxu0 0.0
    %191 = vmatpush1.msra.mxu0 0.0
    %192 = vmatprep.subr.mxu0 0.0
    %193 = vmatpush1.msra.mxu0 0.0
    %194 = vmatprep.subr.mxu0 0.0
    %195 = vmatpush1.msra.mxu0 0.0
    %196 = vmatprep.subr.mxu0 0.0
    %197 = vmatpush1.msra.mxu0 0.0
    %198 = vmatprep.subr.mxu0 0.0
    %199 = vmatpush1.msra.mxu0 0.0
    %200 = vmatprep.subr.mxu0 0.0
    %201 = vmatpush1.msra.mxu0 0.0
    %202 = vmatprep.subr.mxu0 0.0
    %203 = vmatpush1.msra.mxu0 0.0
    %204 = vmatprep.subr.mxu0 0.0
    %205 = vmatpush1.msra.mxu0 0.0
    %206 = vmatprep.subr.mxu0 0.0
    %207 = vmatpush1.msra.mxu0 0.0
    %208 = vmatprep.subr.mxu0 0.0
    %209 = vmatpush1.msra.mxu0 0.0
    %210 = vmatprep.subr.mxu0 0.0
    %211 = vmatpush1.msra.mxu0 0.0
    %212 = vmatprep.subr.mxu0 0.0
    %213 = vmatpush1.msra.mxu0 0.0
    %214 = vmatprep.subr.mxu0 0.0
    %215 = vmatpush1.msra.mxu0 0.0
    %216 = vmatprep.subr.mxu0 0.0
    %217 = vmatpush1.msra.mxu0 0.0
    %218 = vmatprep.subr.mxu0 0.0
    %219 = vmatpush1.msra.mxu0 0.0
    %220 = vmatprep.mubr.f32.mxu0 0.0
    %221 = vmatmul.mubr.f32.gmra.mrb[0].mxu0 %v138
    %v222 = vpop.f32.mrb[0].mxu0
    %v223 = vadd.f32 0.0, %v222
    %v224 = vpop.f32.mrb[0].mxu0
    %225 = vdwg.mxu0
    %v226 = vadd.f32 %v139, %v223
    %227 = vst [vmem:[#allocation2] sm:$0xff] %v226
    // Predicated region
    $region30: #{mlp_forward.1} parent=1 // pred_check
      %p228 = pneg %p46
    $region31: #{mlp_forward.1} parent=1 // pred_check_branch
      %230 = sbr.rel (%p228) target = $region33
    $region32: #{mlp_forward.1} parent=1 // pred_region
      %v231 = vld [vmem:[#allocation2] sm:$0xff]
      %v232 = vld [vmem:[%s3] sm:$0x1]
      %v234 = vlaneseq
      %v235 = vshrl.u32 %v234, 7
      %v236 = vsub.s32 0, %v235
      %v237 = vrot.slane %v232, %v236
      %v239 = vadd.f32 %v231, %v237
      %240 = vst [vmem:[#allocation8] sm:$0xff] %v239
    $region33: #{mlp_forward.1} parent=1 // pred_fallthru
      _
    // Predicated region
    $region34: #{mlp_forward.1} parent=1 // pred_check
      _
    $region35: #{mlp_forward.1} parent=1 // pred_check_branch
      %242 = sbr.rel (0) target = $region37
    $region36: #{mlp_forward.1} parent=1 // pred_region
      %s244 = ssub.s32 128, 128
      %245 = vsyncadd [#allocation5], %s244
      %s247 = sshll.u32 [#allocation8], 4
      %s248 = int_to_ptr.vmem [resolvable:$true] %s247
      %250 = dma.vmem_to_hbm [thread:$0]  %s248, 128, %s4, [#allocation5]
    $region37: #{mlp_forward.1} parent=1 // pred_fallthru
      _
    // Predicated region
    $region38: #{mlp_forward.1} parent=1 // pred_check
      _
    $region39: #{mlp_forward.1} parent=1 // pred_check_branch
      %252 = sbr.rel (0) target = $region41
    $region40: #{mlp_forward.1} parent=1 // pred_region
      %253 = dma.done [#allocation5], 128
    $region41: #{mlp_forward.1} parent=1 // pred_fallthru
      _
    %254 = vsyncpa [#allocation4], 1
    %255 = vsyncpa [#allocation7], 1
    %256 = vsyncpa [#allocation5], 1

</llo_original>
